<compile_context>
chip_gen: v7x
topology: tpu7x:2x2x1
jax: 0.10.0
libtpu: 0.0.40
codegen_flags: <defaults>
</compile_context>

<pallas_src>
import jax
import jax.numpy as jnp
from jax.experimental import pallas as pl
from jax.experimental.pallas import tpu as pltpu


def _softmax_last(z):
    # softmax over the last axis (nn.Softmax() on a 2-D input => dim=1)
    m = jnp.max(z, axis=-1, keepdims=True)
    e = jnp.exp(z - m)
    s = jnp.sum(e, axis=-1, keepdims=True)
    return e * pl.reciprocal(s, approx=True)   # EUP reciprocal, VALU stays free


def _nn_supervised_kernel(
    x_ref,      # [TILE_B, num_ver]   f32 (streamed)
    w1_ref,     # [num_ver, y_shape]  bf16 (fc_x1.weight.T, resident)
    b1_ref,     # [1, y_shape]        f32
    wh_ref,     # [num_ver, emb]      bf16 (hiddenLayerWeight.T, resident)
    w2_ref,     # [emb, y_shape]      f32  (fc_x2_2.weight.T)
    b2_ref,     # [1, y_shape]        f32
    wc1_ref,    # [y_shape, y_shape]  f32  (fc_cat.weight.T, rows 0:y_shape)
    wc2_ref,    # [y_shape, y_shape]  f32  (fc_cat.weight.T, rows y_shape:2*y_shape)
    bc_ref,     # [1, y_shape]        f32
    out_ref,    # [TILE_B, 3*y_shape] bf16 packed: [l_x_1 | l_x_2 | l_x]
):
    # Stream x in f32; cast to bf16 in-VMEM for the MXU dots (no extra HBM pass).
    x = x_ref[...].astype(jnp.bfloat16)

    # ---- branch 1: l_x_1 = softmax(fc_x1(x)) ----
    z1 = jnp.dot(x, w1_ref[...], preferred_element_type=jnp.float32) + b1_ref[...]
    l_x_1 = _softmax_last(z1)

    # ---- branch 2: l_x_2 = softmax(fc_x2_2(relu(x @ hiddenLayerWeight.T))) ----
    h = jnp.maximum(jnp.dot(x, wh_ref[...], preferred_element_type=jnp.float32),
                    jnp.float32(0.0))
    z2 = jnp.dot(h, w2_ref[...], preferred_element_type=jnp.float32) + b2_ref[...]
    l_x_2 = _softmax_last(z2)

    # ---- fusion: l_x = softmax(fc_cat(cat([l_x_1, l_x_2], dim=1))) ----
    # cat + one matmul  ==  two matmuls against the split halves of fc_cat.weight.T
    zc = (jnp.dot(l_x_1, wc1_ref[...], preferred_element_type=jnp.float32)
          + jnp.dot(l_x_2, wc2_ref[...], preferred_element_type=jnp.float32)
          + bc_ref[...])
    l_x = _softmax_last(zc)

    # One lane-packed bf16 store per tile: [l_x_1 | l_x_2 | l_x].
    out_ref[...] = jnp.concatenate([l_x_1, l_x_2, l_x], axis=-1).astype(out_ref.dtype)


def _choose_tile_b(B, num_ver, y_shape, tile_b=None):
    """Batch tile from a per-step byte budget, capped to keep >= 4 grid steps."""
    if tile_b is None:
        # Target ~2 MiB of streamed bytes per grid step (f32 x + bf16 output),
        # well above the ~0.35 us per-step overhead.
        bytes_per_row = num_ver * 4 + 3 * y_shape * 2
        tile_b = (2 * 1024 * 1024) // max(bytes_per_row, 1)
    # Keep a few grid steps when the batch allows (pipelining + v7x megacore).
    min_steps = 4
    if B >= min_steps * 8:
        tile_b = min(tile_b, B // min_steps)
    tile_b = max(8, (min(tile_b, max(B, 1)) // 8) * 8)
    if B < 8:
        tile_b = B
    return tile_b


def _vmem_budget_bytes(tile_b, num_ver, emb, y_shape):
    """Rough VMEM usage: double-buffered x/out tiles + resident weights + f32 temps."""
    x_tile = tile_b * num_ver * 4
    out_tile = tile_b * 3 * y_shape * 2
    weights = (num_ver * (y_shape + emb) * 2
               + (emb * y_shape + 2 * y_shape * y_shape + 3 * y_shape) * 4)
    inter = tile_b * (7 * y_shape + emb) * 4   # z1,l1,h,z2,l2,zc,lx (f32)
    return 2 * (x_tile + out_tile + weights) + inter


def neural_net_supervised(x, params, *, tile_b=None):
    """Pallas wrapper. x: [B, num_ver] float32 dense features (x.toarray() equivalent)."""
    B, num_ver = x.shape
    y_shape = params["b1"].shape[-1]
    emb = params["w2"].shape[0]

    # bf16 only on the resident x-side weights (tiny); streamed x stays f32.
    w1 = params["w1"].astype(jnp.bfloat16)
    wh = params["wh"].astype(jnp.bfloat16)

    tile_b = _choose_tile_b(B, num_ver, y_shape, tile_b)

    # Size VMEM limit against v7x's 64 MiB physical VMEM (v5e/v6e have 128 MiB).
    vmem_cap = 48 * 1024 * 1024
    vmem_needed = _vmem_budget_bytes(tile_b, num_ver, emb, y_shape)
    while vmem_needed > vmem_cap and tile_b > 8:
        tile_b = max(8, (tile_b // 2 // 8) * 8)
        vmem_needed = _vmem_budget_bytes(tile_b, num_ver, emb, y_shape)
    vmem_limit = int(min(vmem_cap, max(vmem_needed + (8 << 20), 16 << 20)))

    grid = (pl.cdiv(B, tile_b),)
    w_spec = lambda shape: pl.BlockSpec(shape, lambda i: (0, 0))   # resident across grid

    cost = pl.CostEstimate(
        flops=2 * B * (num_ver * (y_shape + emb) + emb * y_shape + 2 * y_shape * y_shape),
        transcendentals=3 * B * y_shape + 3 * B,
        bytes_accessed=int(
            B * num_ver * 4                      # f32 x (streamed)
            + B * 3 * y_shape * 2                # packed bf16 output
            + num_ver * (y_shape + emb) * 2      # bf16 x-side weights
            + (emb * y_shape + 2 * y_shape * y_shape + 3 * y_shape) * 4
        ),
    )

    packed = pl.pallas_call(
        _nn_supervised_kernel,
        out_shape=jax.ShapeDtypeStruct((B, 3 * y_shape), jnp.bfloat16),
        grid=grid,
        in_specs=[
            pl.BlockSpec((tile_b, num_ver), lambda i: (i, 0)),     # x: streamed / pipelined
            w_spec((num_ver, y_shape)),                            # w1 (bf16)
            w_spec((1, y_shape)),                                  # b1
            w_spec((num_ver, emb)),                                # wh (bf16)
            w_spec((emb, y_shape)),                                # w2
            w_spec((1, y_shape)),                                  # b2
            w_spec((y_shape, y_shape)),                            # wc1
            w_spec((y_shape, y_shape)),                            # wc2
            w_spec((1, y_shape)),                                  # bc
        ],
        out_specs=pl.BlockSpec((tile_b, 3 * y_shape), lambda i: (i, 0)),
        compiler_params=pltpu.CompilerParams(
            dimension_semantics=("parallel",),    # megacore split on v7x; no-op on v5e/v6e
            vmem_limit_bytes=vmem_limit,
        ),
        cost_estimate=cost,
    )(x, w1, params["b1"], wh, params["w2"], params["b2"],
      params["wc1"], params["wc2"], params["bc"])

    l_x_1 = packed[:, :y_shape].astype(jnp.float32)
    l_x_2 = packed[:, y_shape:2 * y_shape].astype(jnp.float32)
    l_x = packed[:, 2 * y_shape:].astype(jnp.float32)
    return l_x_1, l_x_2, l_x


def _reference(x, params):
    """Pure-JAX reference mirroring the PyTorch forward (same bf16 cast of x / x-weights)."""
    xb = x.astype(jnp.bfloat16).astype(jnp.float32)
    w1 = params["w1"].astype(jnp.bfloat16).astype(jnp.float32)
    wh = params["wh"].astype(jnp.bfloat16).astype(jnp.float32)
    l1 = jax.nn.softmax(xb @ w1 + params["b1"], axis=-1)
    h = jnp.maximum(xb @ wh, 0.0)
    l2 = jax.nn.softmax(h @ params["w2"] + params["b2"], axis=-1)
    cat = jnp.concatenate([l1, l2], axis=1)
    wc = jnp.concatenate([params["wc1"], params["wc2"]], axis=0)
    lx = jax.nn.softmax(cat @ wc + params["bc"], axis=-1)
    return l1, l2, lx


def make_params(key, num_ver, embedding_size, y_shape):
    """Deterministic synthetic parameters (PyTorch-Linear-style uniform init)."""
    ks = jax.random.split(key, 8)

    def lin(k, fan_in, shape):
        bound = 1.0 / jnp.sqrt(jnp.float32(fan_in))
        return jax.random.uniform(k, shape, jnp.float32, -bound, bound)

    return {
        # fc_x1: Linear(num_ver, y_shape) -> stored transposed
        "w1": lin(ks[0], num_ver, (num_ver, y_shape)),
        "b1": lin(ks[1], num_ver, (1, y_shape)),
        # hiddenLayerWeight: [embedding_size, num_ver]; kernel uses its transpose
        "wh": lin(ks[2], num_ver, (num_ver, embedding_size)),
        # fc_x2_2: Linear(embedding_size, y_shape) -> transposed
        "w2": lin(ks[3], embedding_size, (embedding_size, y_shape)),
        "b2": lin(ks[4], embedding_size, (1, y_shape)),
        # fc_cat: Linear(2*y_shape, y_shape) -> transposed, kept as two halves
        "wc1": lin(ks[5], 2 * y_shape, (y_shape, y_shape)),
        "wc2": lin(ks[6], 2 * y_shape, (y_shape, y_shape)),
        "bc": lin(ks[7], 2 * y_shape, (1, y_shape)),
    }


if __name__ == "__main__":
    # Small shapes consistent with the module; B chosen so the auto tile picker
    # produces tile_b=64 and a grid of (4,) steps, exercising the pipeline.
    B, num_ver, embedding_size, y_shape = 256, 32, 16, 8

    key = jax.random.PRNGKey(0)
    kx, kp = jax.random.split(key)

    # The PyTorch module densifies a sparse matrix (x.toarray()); we build the
    # equivalent dense [B, num_ver] features directly on-device.
    x = jax.random.uniform(kx, (B, num_ver), jnp.float32)
    params = make_params(kp, num_ver, embedding_size, y_shape)

    l1, l2, lx = neural_net_supervised(x, params)
    jax.block_until_ready((l1, l2, lx))

    r1, r2, rx = _reference(x, params)
    # Tolerance covers the approx (EUP) reciprocal softmax + bf16 output rounding.
    assert jnp.allclose(l1, r1, atol=5e-3), "l_x_1 mismatch"
    assert jnp.allclose(l2, r2, atol=5e-3), "l_x_2 mismatch"
    assert jnp.allclose(lx, rx, atol=5e-3), "l_x mismatch"

    print("KERNEL_OK")
</pallas_src>

<mosaic_0001>
module attributes {stable_mosaic.version = 11 : i64} {
  func.func @_nn_supervised_kernel(%arg0: i32, %arg1: memref<64x32xf32, #tpu.memory_space<vmem>>, %arg2: memref<32x8xbf16, #tpu.memory_space<vmem>>, %arg3: memref<1x8xf32, #tpu.memory_space<vmem>>, %arg4: memref<32x16xbf16, #tpu.memory_space<vmem>>, %arg5: memref<16x8xf32, #tpu.memory_space<vmem>>, %arg6: memref<1x8xf32, #tpu.memory_space<vmem>>, %arg7: memref<8x8xf32, #tpu.memory_space<vmem>>, %arg8: memref<8x8xf32, #tpu.memory_space<vmem>>, %arg9: memref<1x8xf32, #tpu.memory_space<vmem>>, %arg10: memref<64x24xbf16, #tpu.memory_space<vmem>>) attributes {dimension_semantics = [#tpu.dimension_semantics<parallel>], iteration_bounds = array<i64: 4>, scalar_prefetch = 0 : i64, scratch_operands = 0 : i64, tpu.core_type = #tpu.core_type<tc>, window_params = [{transform_indices = @transform_0, window_bounds = array<i64: 64, 32>}, {pipeline_mode = #tpu.pipeline_mode<synchronous>, transform_indices = @transform_1, window_bounds = array<i64: 32, 8>}, {pipeline_mode = #tpu.pipeline_mode<synchronous>, transform_indices = @transform_2, window_bounds = array<i64: 1, 8>}, {pipeline_mode = #tpu.pipeline_mode<synchronous>, transform_indices = @transform_3, window_bounds = array<i64: 32, 16>}, {pipeline_mode = #tpu.pipeline_mode<synchronous>, transform_indices = @transform_4, window_bounds = array<i64: 16, 8>}, {pipeline_mode = #tpu.pipeline_mode<synchronous>, transform_indices = @transform_5, window_bounds = array<i64: 1, 8>}, {pipeline_mode = #tpu.pipeline_mode<synchronous>, transform_indices = @transform_6, window_bounds = array<i64: 8, 8>}, {pipeline_mode = #tpu.pipeline_mode<synchronous>, transform_indices = @transform_7, window_bounds = array<i64: 8, 8>}, {pipeline_mode = #tpu.pipeline_mode<synchronous>, transform_indices = @transform_8, window_bounds = array<i64: 1, 8>}, {transform_indices = @transform_9, window_bounds = array<i64: 64, 24>}]} {
    %c0 = arith.constant 0 : index
    %c0_0 = arith.constant 0 : index
    %0 = vector.load %arg1[%c0, %c0_0] : memref<64x32xf32, #tpu.memory_space<vmem>>, vector<64x32xf32>
    %1 = arith.truncf %0 : vector<64x32xf32> to vector<64x32xbf16>
    %c0_1 = arith.constant 0 : index
    %c0_2 = arith.constant 0 : index
    %2 = vector.load %arg2[%c0_1, %c0_2] : memref<32x8xbf16, #tpu.memory_space<vmem>>, vector<32x8xbf16>
    %cst = arith.constant dense<0.000000e+00> : vector<64x8xf32>
    %3 = tpu.matmul %1, %2, %cst {dimension_numbers = #tpu.dot_dimension_numbers<[1], [0], [0], [1], [0, 0, 1, 1], [], []>} : vector<64x32xbf16>, vector<32x8xbf16>, vector<64x8xf32> -> vector<64x8xf32>
    %c0_3 = arith.constant 0 : index
    %c0_4 = arith.constant 0 : index
    %4 = vector.load %arg3[%c0_3, %c0_4] : memref<1x8xf32, #tpu.memory_space<vmem>>, vector<1x8xf32>
    %5 = vector.broadcast %4 : vector<1x8xf32> to vector<64x8xf32>
    %6 = arith.addf %3, %5 : vector<64x8xf32>
    %cst_5 = arith.constant dense<0xFF800000> : vector<64xf32>
    %7 = vector.multi_reduction <maximumf>, %6, %cst_5 [1] : vector<64x8xf32> to vector<64xf32>
    %8 = vector.shape_cast %7 : vector<64xf32> to vector<64x1xf32>
    %9 = vector.broadcast %8 : vector<64x1xf32> to vector<64x8xf32>
    %10 = arith.subf %6, %9 : vector<64x8xf32>
    %11 = math.exp %10 : vector<64x8xf32>
    %cst_6 = arith.constant dense<0.000000e+00> : vector<64xf32>
    %12 = vector.multi_reduction <add>, %11, %cst_6 [1] : vector<64x8xf32> to vector<64xf32>
    %13 = vector.shape_cast %12 : vector<64xf32> to vector<64x1xf32>
    %14 = tpu.reciprocal %13 {approx = true} : vector<64x1xf32> -> vector<64x1xf32>
    %15 = vector.broadcast %14 : vector<64x1xf32> to vector<64x8xf32>
    %16 = arith.mulf %11, %15 : vector<64x8xf32>
    %c0_7 = arith.constant 0 : index
    %c0_8 = arith.constant 0 : index
    %17 = vector.load %arg4[%c0_7, %c0_8] : memref<32x16xbf16, #tpu.memory_space<vmem>>, vector<32x16xbf16>
    %cst_9 = arith.constant dense<0.000000e+00> : vector<64x16xf32>
    %18 = tpu.matmul %1, %17, %cst_9 {dimension_numbers = #tpu.dot_dimension_numbers<[1], [0], [0], [1], [0, 0, 1, 1], [], []>} : vector<64x32xbf16>, vector<32x16xbf16>, vector<64x16xf32> -> vector<64x16xf32>
    %cst_10 = arith.constant 0.000000e+00 : f32
    %19 = vector.broadcast %cst_10 : f32 to vector<64x16xf32>
    %20 = arith.maximumf %18, %19 : vector<64x16xf32>
    %c0_11 = arith.constant 0 : index
    %c0_12 = arith.constant 0 : index
    %21 = vector.load %arg5[%c0_11, %c0_12] : memref<16x8xf32, #tpu.memory_space<vmem>>, vector<16x8xf32>
    %cst_13 = arith.constant dense<0.000000e+00> : vector<64x8xf32>
    %22 = tpu.matmul %20, %21, %cst_13 {dimension_numbers = #tpu.dot_dimension_numbers<[1], [0], [0], [1], [0, 0, 1, 1], [], []>} : vector<64x16xf32>, vector<16x8xf32>, vector<64x8xf32> -> vector<64x8xf32>
    %c0_14 = arith.constant 0 : index
    %c0_15 = arith.constant 0 : index
    %23 = vector.load %arg6[%c0_14, %c0_15] : memref<1x8xf32, #tpu.memory_space<vmem>>, vector<1x8xf32>
    %24 = vector.broadcast %23 : vector<1x8xf32> to vector<64x8xf32>
    %25 = arith.addf %22, %24 : vector<64x8xf32>
    %cst_16 = arith.constant dense<0xFF800000> : vector<64xf32>
    %26 = vector.multi_reduction <maximumf>, %25, %cst_16 [1] : vector<64x8xf32> to vector<64xf32>
    %27 = vector.shape_cast %26 : vector<64xf32> to vector<64x1xf32>
    %28 = vector.broadcast %27 : vector<64x1xf32> to vector<64x8xf32>
    %29 = arith.subf %25, %28 : vector<64x8xf32>
    %30 = math.exp %29 : vector<64x8xf32>
    %cst_17 = arith.constant dense<0.000000e+00> : vector<64xf32>
    %31 = vector.multi_reduction <add>, %30, %cst_17 [1] : vector<64x8xf32> to vector<64xf32>
    %32 = vector.shape_cast %31 : vector<64xf32> to vector<64x1xf32>
    %33 = tpu.reciprocal %32 {approx = true} : vector<64x1xf32> -> vector<64x1xf32>
    %34 = vector.broadcast %33 : vector<64x1xf32> to vector<64x8xf32>
    %35 = arith.mulf %30, %34 : vector<64x8xf32>
    %c0_18 = arith.constant 0 : index
    %c0_19 = arith.constant 0 : index
    %36 = vector.load %arg7[%c0_18, %c0_19] : memref<8x8xf32, #tpu.memory_space<vmem>>, vector<8x8xf32>
    %cst_20 = arith.constant dense<0.000000e+00> : vector<64x8xf32>
    %37 = tpu.matmul %16, %36, %cst_20 {dimension_numbers = #tpu.dot_dimension_numbers<[1], [0], [0], [1], [0, 0, 1, 1], [], []>} : vector<64x8xf32>, vector<8x8xf32>, vector<64x8xf32> -> vector<64x8xf32>
    %c0_21 = arith.constant 0 : index
    %c0_22 = arith.constant 0 : index
    %38 = vector.load %arg8[%c0_21, %c0_22] : memref<8x8xf32, #tpu.memory_space<vmem>>, vector<8x8xf32>
    %cst_23 = arith.constant dense<0.000000e+00> : vector<64x8xf32>
    %39 = tpu.matmul %35, %38, %cst_23 {dimension_numbers = #tpu.dot_dimension_numbers<[1], [0], [0], [1], [0, 0, 1, 1], [], []>} : vector<64x8xf32>, vector<8x8xf32>, vector<64x8xf32> -> vector<64x8xf32>
    %40 = arith.addf %37, %39 : vector<64x8xf32>
    %c0_24 = arith.constant 0 : index
    %c0_25 = arith.constant 0 : index
    %41 = vector.load %arg9[%c0_24, %c0_25] : memref<1x8xf32, #tpu.memory_space<vmem>>, vector<1x8xf32>
    %42 = vector.broadcast %41 : vector<1x8xf32> to vector<64x8xf32>
    %43 = arith.addf %40, %42 : vector<64x8xf32>
    %cst_26 = arith.constant dense<0xFF800000> : vector<64xf32>
    %44 = vector.multi_reduction <maximumf>, %43, %cst_26 [1] : vector<64x8xf32> to vector<64xf32>
    %45 = vector.shape_cast %44 : vector<64xf32> to vector<64x1xf32>
    %46 = vector.broadcast %45 : vector<64x1xf32> to vector<64x8xf32>
    %47 = arith.subf %43, %46 : vector<64x8xf32>
    %48 = math.exp %47 : vector<64x8xf32>
    %cst_27 = arith.constant dense<0.000000e+00> : vector<64xf32>
    %49 = vector.multi_reduction <add>, %48, %cst_27 [1] : vector<64x8xf32> to vector<64xf32>
    %50 = vector.shape_cast %49 : vector<64xf32> to vector<64x1xf32>
    %51 = tpu.reciprocal %50 {approx = true} : vector<64x1xf32> -> vector<64x1xf32>
    %52 = vector.broadcast %51 : vector<64x1xf32> to vector<64x8xf32>
    %53 = arith.mulf %48, %52 : vector<64x8xf32>
    %54 = tpu.concatenate %16, %35, %53 in 1 : vector<64x8xf32>, vector<64x8xf32>, vector<64x8xf32> -> vector<64x24xf32>
    %55 = arith.truncf %54 : vector<64x24xf32> to vector<64x24xbf16>
    %c0_28 = arith.constant 0 : index
    %c0_29 = arith.constant 0 : index
    %56 = vector.load %arg10[%c0_28, %c0_29] : memref<64x24xbf16, #tpu.memory_space<vmem>>, vector<64x24xbf16>
    tpu.vector_store %arg10[%c0_28, %c0_29], %55 {strides = array<i32>} : memref<64x24xbf16, #tpu.memory_space<vmem>>, vector<64x24xbf16>,
    return
  }
  func.func @transform_0(%arg0: i32) -> (i32, i32) {
    %c0_i32 = arith.constant 0 : i32
    %c0_i32_0 = arith.constant 0 : i32
    return %arg0, %c0_i32 : i32, i32
  }
  func.func @transform_1(%arg0: i32) -> (i32, i32) {
    %c0_i32 = arith.constant 0 : i32
    %c0_i32_0 = arith.constant 0 : i32
    %c0_i32_1 = arith.constant 0 : i32
    return %c0_i32, %c0_i32_0 : i32, i32
  }
  func.func @transform_2(%arg0: i32) -> (i32, i32) {
    %c0_i32 = arith.constant 0 : i32
    %c0_i32_0 = arith.constant 0 : i32
    %c0_i32_1 = arith.constant 0 : i32
    return %c0_i32, %c0_i32_0 : i32, i32
  }
  func.func @transform_3(%arg0: i32) -> (i32, i32) {
    %c0_i32 = arith.constant 0 : i32
    %c0_i32_0 = arith.constant 0 : i32
    %c0_i32_1 = arith.constant 0 : i32
    return %c0_i32, %c0_i32_0 : i32, i32
  }
  func.func @transform_4(%arg0: i32) -> (i32, i32) {
    %c0_i32 = arith.constant 0 : i32
    %c0_i32_0 = arith.constant 0 : i32
    %c0_i32_1 = arith.constant 0 : i32
    return %c0_i32, %c0_i32_0 : i32, i32
  }
  func.func @transform_5(%arg0: i32) -> (i32, i32) {
    %c0_i32 = arith.constant 0 : i32
    %c0_i32_0 = arith.constant 0 : i32
    %c0_i32_1 = arith.constant 0 : i32
    return %c0_i32, %c0_i32_0 : i32, i32
  }
  func.func @transform_6(%arg0: i32) -> (i32, i32) {
    %c0_i32 = arith.constant 0 : i32
    %c0_i32_0 = arith.constant 0 : i32
    %c0_i32_1 = arith.constant 0 : i32
    return %c0_i32, %c0_i32_0 : i32, i32
  }
  func.func @transform_7(%arg0: i32) -> (i32, i32) {
    %c0_i32 = arith.constant 0 : i32
    %c0_i32_0 = arith.constant 0 : i32
    %c0_i32_1 = arith.constant 0 : i32
    return %c0_i32, %c0_i32_0 : i32, i32
  }
  func.func @transform_8(%arg0: i32) -> (i32, i32) {
    %c0_i32 = arith.constant 0 : i32
    %c0_i32_0 = arith.constant 0 : i32
    %c0_i32_1 = arith.constant 0 : i32
    return %c0_i32, %c0_i32_0 : i32, i32
  }
  func.func @transform_9(%arg0: i32) -> (i32, i32) {
    %c0_i32 = arith.constant 0 : i32
    %c0_i32_0 = arith.constant 0 : i32
    return %arg0, %c0_i32 : i32, i32
  }
}

</mosaic_0001>

<llo_original>
// kernel: tpu_custom_call.1
$region0: #{tpu_custom_call.1}
  #allocation0 [shape = 'u32[]', space=smem, size = 0x4, offset = 0x4, fixed_abs, tag = 'smem constant byte address 0x4 - core index']
  #allocation1 [shape = 'u32[144,128]{1,0:T(1,128)}', space=vmem, size = 0x12000, scoped, tag = 'internal scratch']
  %s0 = inlined_call_operand.vmem [shape: f32[256,32], index: 0, kind: input, shape index: {}]
  %s1 = inlined_call_operand.vmem [shape: bf16[32,8], index: 1, kind: input, shape index: {}]
  %s2 = inlined_call_operand.vmem [shape: f32[1,8], index: 2, kind: input, shape index: {}]
  %s3 = inlined_call_operand.vmem [shape: bf16[32,16], index: 3, kind: input, shape index: {}]
  %s4 = inlined_call_operand.vmem [shape: f32[16,8], index: 4, kind: input, shape index: {}]
  %s5 = inlined_call_operand.vmem [shape: f32[1,8], index: 5, kind: input, shape index: {}]
  %s6 = inlined_call_operand.vmem [shape: f32[8,8], index: 6, kind: input, shape index: {}]
  %s7 = inlined_call_operand.vmem [shape: f32[8,8], index: 7, kind: input, shape index: {}]
  %s8 = inlined_call_operand.vmem [shape: f32[1,8], index: 8, kind: input, shape index: {}]
  %s9 = inlined_call_operand.vmem [shape: bf16[256,24], index: 9, kind: output, shape index: {}]
  %s10 = sld [smem:[#allocation0]]
  $region69: #{tpu_custom_call.1} parent=0
    _
  %s12 = ssub.s32 1, %s10
  %s13 = scalar_select 0, %s12, %s10
  loop: start=0, step=1, limit=6
  $region2: #{tpu_custom_call.1} parent=0 // loop_pre_header
    _
  $region3: #{tpu_custom_call.1} parent=0 // loop_header
    %s15 = sphi 0, %s19
    %p16 = scmp.ge.s32.totalorder %s15, 6
    %s25 = sphi 0, %s27
    %s28 = sphi 0, %s25
    %s29 = sphi 0, %s28
    %s45 = sphi 0, %s29
    %s49 = sphi 0, %s49
    %s51 = sphi 0, %s49
    %s52 = sphi 0, %s51
    %s66 = sphi 0, %s52
    %s70 = sphi 0, %s70
    %s72 = sphi 0, %s70
    %s73 = sphi 0, %s72
    %s87 = sphi 0, %s73
    %s91 = sphi 0, %s91
    %s93 = sphi 0, %s91
    %s94 = sphi 0, %s93
    %s108 = sphi 0, %s94
    %s112 = sphi 0, %s112
    %s114 = sphi 0, %s112
    %s115 = sphi 0, %s114
    %s129 = sphi 0, %s115
    %s133 = sphi 0, %s133
    %s135 = sphi 0, %s133
    %s136 = sphi 0, %s135
    %s150 = sphi 0, %s136
    %s154 = sphi 0, %s154
    %s156 = sphi 0, %s154
    %s157 = sphi 0, %s156
    %s171 = sphi 0, %s157
    %s175 = sphi 0, %s175
    %s177 = sphi 0, %s175
    %s178 = sphi 0, %s177
    %s192 = sphi 0, %s178
    %s196 = sphi 0, %s196
    %s198 = sphi 0, %s196
    %s199 = sphi 0, %s198
    %s213 = sphi 0, %s199
    %s219 = sphi 0, %s221
    %s222 = sphi 0, %s219
    %s223 = sphi 0, %s222
    %s239 = sphi 0, %s223
  $region4: #{tpu_custom_call.1} parent=0 // loop_header_branch
    %18 = sbr.rel (%p16) target = $region8
  $region5: #{tpu_custom_call.1} parent=0 // loop_body
    %s20 = ssub.s32 %s15, 1
    %s21 = ssub.s32 %s15, 2
    %s22 = sadd.s32 %s15, 1
    %s23 = ssub.s32 %s15, %s22
    %p24 = scmp.eq.s32.totalorder %s23, 0
    %s26 = sadd.s32 %s25, 1
    %s27 = scalar_select %p24, %s25, %s26
    %p30 = pneg %p24
    %p31 = scmp.eq.s32.totalorder %s15, 3
    %p32 = por %p30, %p31
    %p33 = scmp.ne.s32.totalorder %s25, %s28
    %p34 = scmp.eq.s32.totalorder %s15, 0
    %p35 = por %p33, %p34
    %p36 = scmp.ne.s32.totalorder %s25, %s28
    %p37 = scmp.eq.s32.totalorder %s20, 3
    %p38 = por %p36, %p37
    %p39 = scmp.ne.s32.totalorder %s28, %s29
    %p40 = scmp.eq.s32.totalorder %s20, 0
    %p41 = por %p39, %p40
    %p42 = scmp.ne.s32.totalorder %s28, %s29
    %p43 = scmp.eq.s32.totalorder %s21, 3
    %p44 = por %p42, %p43
    %p46 = scmp.ne.s32.totalorder %s29, %s45
    %p47 = scmp.eq.s32.totalorder %s21, 0
    %p48 = por %p46, %p47
    %s50 = sadd.s32 %s49, 1
    %p53 = scmp.eq.s32.totalorder %s15, 3
    %p54 = scmp.ne.s32.totalorder %s49, %s51
    %p55 = scmp.eq.s32.totalorder %s15, 0
    %p56 = por %p54, %p55
    %p57 = scmp.ne.s32.totalorder %s49, %s51
    %p58 = scmp.eq.s32.totalorder %s20, 3
    %p59 = por %p57, %p58
    %p60 = scmp.ne.s32.totalorder %s51, %s52
    %p61 = scmp.eq.s32.totalorder %s20, 0
    %p62 = por %p60, %p61
    %p63 = scmp.ne.s32.totalorder %s51, %s52
    %p64 = scmp.eq.s32.totalorder %s21, 3
    %p65 = por %p63, %p64
    %p67 = scmp.ne.s32.totalorder %s52, %s66
    %p68 = scmp.eq.s32.totalorder %s21, 0
    %p69 = por %p67, %p68
    %s71 = sadd.s32 %s70, 1
    %p74 = scmp.eq.s32.totalorder %s15, 3
    %p75 = scmp.ne.s32.totalorder %s70, %s72
    %p76 = scmp.eq.s32.totalorder %s15, 0
    %p77 = por %p75, %p76
    %p78 = scmp.ne.s32.totalorder %s70, %s72
    %p79 = scmp.eq.s32.totalorder %s20, 3
    %p80 = por %p78, %p79
    %p81 = scmp.ne.s32.totalorder %s72, %s73
    %p82 = scmp.eq.s32.totalorder %s20, 0
    %p83 = por %p81, %p82
    %p84 = scmp.ne.s32.totalorder %s72, %s73
    %p85 = scmp.eq.s32.totalorder %s21, 3
    %p86 = por %p84, %p85
    %p88 = scmp.ne.s32.totalorder %s73, %s87
    %p89 = scmp.eq.s32.totalorder %s21, 0
    %p90 = por %p88, %p89
    %s92 = sadd.s32 %s91, 1
    %p95 = scmp.eq.s32.totalorder %s15, 3
    %p96 = scmp.ne.s32.totalorder %s91, %s93
    %p97 = scmp.eq.s32.totalorder %s15, 0
    %p98 = por %p96, %p97
    %p99 = scmp.ne.s32.totalorder %s91, %s93
    %p100 = scmp.eq.s32.totalorder %s20, 3
    %p101 = por %p99, %p100
    %p102 = scmp.ne.s32.totalorder %s93, %s94
    %p103 = scmp.eq.s32.totalorder %s20, 0
    %p104 = por %p102, %p103
    %p105 = scmp.ne.s32.totalorder %s93, %s94
    %p106 = scmp.eq.s32.totalorder %s21, 3
    %p107 = por %p105, %p106
    %p109 = scmp.ne.s32.totalorder %s94, %s108
    %p110 = scmp.eq.s32.totalorder %s21, 0
    %p111 = por %p109, %p110
    %s113 = sadd.s32 %s112, 1
    %p116 = scmp.eq.s32.totalorder %s15, 3
    %p117 = scmp.ne.s32.totalorder %s112, %s114
    %p118 = scmp.eq.s32.totalorder %s15, 0
    %p119 = por %p117, %p118
    %p120 = scmp.ne.s32.totalorder %s112, %s114
    %p121 = scmp.eq.s32.totalorder %s20, 3
    %p122 = por %p120, %p121
    %p123 = scmp.ne.s32.totalorder %s114, %s115
    %p124 = scmp.eq.s32.totalorder %s20, 0
    %p125 = por %p123, %p124
    %p126 = scmp.ne.s32.totalorder %s114, %s115
    %p127 = scmp.eq.s32.totalorder %s21, 3
    %p128 = por %p126, %p127
    %p130 = scmp.ne.s32.totalorder %s115, %s129
    %p131 = scmp.eq.s32.totalorder %s21, 0
    %p132 = por %p130, %p131
    %s134 = sadd.s32 %s133, 1
    %p137 = scmp.eq.s32.totalorder %s15, 3
    %p138 = scmp.ne.s32.totalorder %s133, %s135
    %p139 = scmp.eq.s32.totalorder %s15, 0
    %p140 = por %p138, %p139
    %p141 = scmp.ne.s32.totalorder %s133, %s135
    %p142 = scmp.eq.s32.totalorder %s20, 3
    %p143 = por %p141, %p142
    %p144 = scmp.ne.s32.totalorder %s135, %s136
    %p145 = scmp.eq.s32.totalorder %s20, 0
    %p146 = por %p144, %p145
    %p147 = scmp.ne.s32.totalorder %s135, %s136
    %p148 = scmp.eq.s32.totalorder %s21, 3
    %p149 = por %p147, %p148
    %p151 = scmp.ne.s32.totalorder %s136, %s150
    %p152 = scmp.eq.s32.totalorder %s21, 0
    %p153 = por %p151, %p152
    %s155 = sadd.s32 %s154, 1
    %p158 = scmp.eq.s32.totalorder %s15, 3
    %p159 = scmp.ne.s32.totalorder %s154, %s156
    %p160 = scmp.eq.s32.totalorder %s15, 0
    %p161 = por %p159, %p160
    %p162 = scmp.ne.s32.totalorder %s154, %s156
    %p163 = scmp.eq.s32.totalorder %s20, 3
    %p164 = por %p162, %p163
    %p165 = scmp.ne.s32.totalorder %s156, %s157
    %p166 = scmp.eq.s32.totalorder %s20, 0
    %p167 = por %p165, %p166
    %p168 = scmp.ne.s32.totalorder %s156, %s157
    %p169 = scmp.eq.s32.totalorder %s21, 3
    %p170 = por %p168, %p169
    %p172 = scmp.ne.s32.totalorder %s157, %s171
    %p173 = scmp.eq.s32.totalorder %s21, 0
    %p174 = por %p172, %p173
    %s176 = sadd.s32 %s175, 1
    %p179 = scmp.eq.s32.totalorder %s15, 3
    %p180 = scmp.ne.s32.totalorder %s175, %s177
    %p181 = scmp.eq.s32.totalorder %s15, 0
    %p182 = por %p180, %p181
    %p183 = scmp.ne.s32.totalorder %s175, %s177
    %p184 = scmp.eq.s32.totalorder %s20, 3
    %p185 = por %p183, %p184
    %p186 = scmp.ne.s32.totalorder %s177, %s178
    %p187 = scmp.eq.s32.totalorder %s20, 0
    %p188 = por %p186, %p187
    %p189 = scmp.ne.s32.totalorder %s177, %s178
    %p190 = scmp.eq.s32.totalorder %s21, 3
    %p191 = por %p189, %p190
    %p193 = scmp.ne.s32.totalorder %s178, %s192
    %p194 = scmp.eq.s32.totalorder %s21, 0
    %p195 = por %p193, %p194
    %s197 = sadd.s32 %s196, 1
    %p200 = scmp.eq.s32.totalorder %s15, 3
    %p201 = scmp.ne.s32.totalorder %s196, %s198
    %p202 = scmp.eq.s32.totalorder %s15, 0
    %p203 = por %p201, %p202
    %p204 = scmp.ne.s32.totalorder %s196, %s198
    %p205 = scmp.eq.s32.totalorder %s20, 3
    %p206 = por %p204, %p205
    %p207 = scmp.ne.s32.totalorder %s198, %s199
    %p208 = scmp.eq.s32.totalorder %s20, 0
    %p209 = por %p207, %p208
    %p210 = scmp.ne.s32.totalorder %s198, %s199
    %p211 = scmp.eq.s32.totalorder %s21, 3
    %p212 = por %p210, %p211
    %p214 = scmp.ne.s32.totalorder %s199, %s213
    %p215 = scmp.eq.s32.totalorder %s21, 0
    %p216 = por %p214, %p215
    %s217 = ssub.s32 %s15, %s22
    %p218 = scmp.eq.s32.totalorder %s217, 0
    %s220 = sadd.s32 %s219, 1
    %s221 = scalar_select %p218, %s219, %s220
    %p224 = pneg %p218
    %p225 = scmp.eq.s32.totalorder %s15, 3
    %p226 = por %p224, %p225
    %p227 = scmp.ne.s32.totalorder %s219, %s222
    %p228 = scmp.eq.s32.totalorder %s15, 0
    %p229 = por %p227, %p228
    %p230 = scmp.ne.s32.totalorder %s219, %s222
    %p231 = scmp.eq.s32.totalorder %s20, 3
    %p232 = por %p230, %p231
    %p233 = scmp.ne.s32.totalorder %s222, %s223
    %p234 = scmp.eq.s32.totalorder %s20, 0
    %p235 = por %p233, %p234
    %p236 = scmp.ne.s32.totalorder %s222, %s223
    %p237 = scmp.eq.s32.totalorder %s21, 3
    %p238 = por %p236, %p237
    %p240 = scmp.ne.s32.totalorder %s223, %s239
    %p241 = scmp.eq.s32.totalorder %s21, 0
    %p242 = por %p240, %p241
    %p243 = scmp.le.s32.totalorder 1, %s15
    %p244 = scmp.lt.s32.totalorder %s15, 5
    %p245 = pnand %p243, %p244
    %p246 = pneg %p245
    // Predicated region
    $region9: #{tpu_custom_call.1} parent=5 // pred_check
      _
    $region10: #{tpu_custom_call.1} parent=5 // pred_check_branch
      %248 = sbr.rel (%p245) target = $region12
    $region11: #{tpu_custom_call.1} parent=5 // pred_region
      %s249 = ssub.s32 %s15, 1
      // Predicated region
      $region13: #{tpu_custom_call.1} parent=11 // pred_check
        %p250 = pneg %p62
      $region14: #{tpu_custom_call.1} parent=11 // pred_check_branch
        %252 = sbr.rel (%p250) target = $region16
      $region15: #{tpu_custom_call.1} parent=11 // pred_region
        _
      $region16: #{tpu_custom_call.1} parent=11 // pred_fallthru
        _
      // Predicated region
      $region17: #{tpu_custom_call.1} parent=11 // pred_check
        %p253 = pneg %p83
      $region18: #{tpu_custom_call.1} parent=11 // pred_check_branch
        %255 = sbr.rel (%p253) target = $region20
      $region19: #{tpu_custom_call.1} parent=11 // pred_region
        _
      $region20: #{tpu_custom_call.1} parent=11 // pred_fallthru
        _
      // Predicated region
      $region21: #{tpu_custom_call.1} parent=11 // pred_check
        %p256 = pneg %p104
      $region22: #{tpu_custom_call.1} parent=11 // pred_check_branch
        %258 = sbr.rel (%p256) target = $region24
      $region23: #{tpu_custom_call.1} parent=11 // pred_region
        _
      $region24: #{tpu_custom_call.1} parent=11 // pred_fallthru
        _
      // Predicated region
      $region25: #{tpu_custom_call.1} parent=11 // pred_check
        %p259 = pneg %p125
      $region26: #{tpu_custom_call.1} parent=11 // pred_check_branch
        %261 = sbr.rel (%p259) target = $region28
      $region27: #{tpu_custom_call.1} parent=11 // pred_region
        _
      $region28: #{tpu_custom_call.1} parent=11 // pred_fallthru
        _
      // Predicated region
      $region29: #{tpu_custom_call.1} parent=11 // pred_check
        %p262 = pneg %p146
      $region30: #{tpu_custom_call.1} parent=11 // pred_check_branch
        %264 = sbr.rel (%p262) target = $region32
      $region31: #{tpu_custom_call.1} parent=11 // pred_region
        _
      $region32: #{tpu_custom_call.1} parent=11 // pred_fallthru
        _
      // Predicated region
      $region33: #{tpu_custom_call.1} parent=11 // pred_check
        %p265 = pneg %p167
      $region34: #{tpu_custom_call.1} parent=11 // pred_check_branch
        %267 = sbr.rel (%p265) target = $region36
      $region35: #{tpu_custom_call.1} parent=11 // pred_region
        _
      $region36: #{tpu_custom_call.1} parent=11 // pred_fallthru
        _
      // Predicated region
      $region37: #{tpu_custom_call.1} parent=11 // pred_check
        %p268 = pneg %p188
      $region38: #{tpu_custom_call.1} parent=11 // pred_check_branch
        %270 = sbr.rel (%p268) target = $region40
      $region39: #{tpu_custom_call.1} parent=11 // pred_region
        _
      $region40: #{tpu_custom_call.1} parent=11 // pred_fallthru
        _
      // Predicated region
      $region41: #{tpu_custom_call.1} parent=11 // pred_check
        %p271 = pneg %p209
      $region42: #{tpu_custom_call.1} parent=11 // pred_check_branch
        %273 = sbr.rel (%p271) target = $region44
      $region43: #{tpu_custom_call.1} parent=11 // pred_region
        _
      $region44: #{tpu_custom_call.1} parent=11 // pred_fallthru
        _
    $region12: #{tpu_custom_call.1} parent=5 // pred_fallthru
      _
    %p274 = scmp.lt.s32.totalorder %s15, 4
    // Predicated region
    $region45: #{tpu_custom_call.1} parent=5 // pred_check
      %p275 = pneg %p274
    $region46: #{tpu_custom_call.1} parent=5 // pred_check_branch
      %277 = sbr.rel (%p275) target = $region48
    $region47: #{tpu_custom_call.1} parent=5 // pred_region
      // Predicated region
      $region49: #{tpu_custom_call.1} parent=47 // pred_check
        %p278 = pneg %p35
      $region50: #{tpu_custom_call.1} parent=47 // pred_check_branch
        %280 = sbr.rel (%p278) target = $region52
      $region51: #{tpu_custom_call.1} parent=47 // pred_region
        %s281 = smul.u32 8, %s15
        %p282 = scmp.lt.s32.totalorder %s281, 31
        %s283 = scalar_select %p282, %s281, 31
        %s284 = smul.addr %s283, 8
        %s285 = scalar_lea.vmem %s0, %s284
        %s286 = smul.u32 8, %s15
      $region52: #{tpu_custom_call.1} parent=47 // pred_fallthru
        _
    $region48: #{tpu_custom_call.1} parent=5 // pred_fallthru
      _
    %p287 = scmp.le.s32.totalorder 1, %s15
    %p288 = scmp.lt.s32.totalorder %s15, 5
    %p289 = pnand %p287, %p288
    %p290 = pneg %p289
    // Predicated region
    $region53: #{tpu_custom_call.1} parent=5 // pred_check
      _
    $region54: #{tpu_custom_call.1} parent=5 // pred_check_branch
      %292 = sbr.rel (%p289) target = $region56
    $region55: #{tpu_custom_call.1} parent=5 // pred_region
      %s293 = ssub.s32 %s15, 1
      %s294 = smul.u32 8, %s20
      %p295 = scmp.lt.s32.totalorder %s294, 31
      %s296 = scalar_select %p295, %s294, 31
      %s297 = smul.addr %s296, 8
      %s298 = scalar_lea.vmem %s0, %s297
      %p299 = pneg %p41
      %p300 = pneg %p38
      %p301 = pneg %p62
      %p302 = pneg %p59
      %p303 = pneg %p83
      %p304 = pneg %p80
      %p305 = pneg %p104
      %p306 = pneg %p101
      %p307 = pneg %p125
      %p308 = pneg %p122
      %p309 = pneg %p146
      %p310 = pneg %p143
      %p311 = pneg %p167
      %p312 = pneg %p164
      %p313 = pneg %p188
      %p314 = pneg %p185
      %p315 = pneg %p209
      %p316 = pneg %p206
      %p317 = pneg %p235
      %p318 = pneg %p232
      %s319 = smul.u32 8, %s20
      %p320 = scmp.lt.s32.totalorder %s319, 31
      %s321 = scalar_select %p320, %s319, 31
      %s322 = smul.addr %s321, 4
      %s323 = scalar_lea.vmem %s9, %s322
      %s324 = smul.u32 8, %s20
      %p325 = scmp.lt.s32.totalorder %s324, 31
      %s326 = scalar_select %p325, %s324, 31
      %s327 = smul.addr %s326, 8
      %s328 = scalar_lea.vmem %s0, %s327
      %s329 = smul.u32 8, %s20
      %s330 = smul.u32 8, %s20
      %p331 = scmp.lt.s32.totalorder %s330, 31
      %s332 = scalar_select %p331, %s330, 31
      %s333 = smul.addr %s332, 4
      %s334 = scalar_lea.vmem %s9, %s333
      %s335 = smul.u32 8, %s20
      %v337 = vld [vmem:[%s328] sm:$0xff]
      %v338 = vld [vmem:[%s328 + $0x8] sm:$0xff]
      %v339 = vld [vmem:[%s328 + $0x10] sm:$0xff]
      %v340 = vld [vmem:[%s328 + $0x18] sm:$0xff]
      %v341 = vld [vmem:[%s328 + $0x20] sm:$0xff]
      %v342 = vld [vmem:[%s328 + $0x28] sm:$0xff]
      %v343 = vld [vmem:[%s328 + $0x30] sm:$0xff]
      %v344 = vld [vmem:[%s328 + $0x38] sm:$0xff]
      %v345 = vpack.c.bf16 %v338, %v337
      %v346 = vpack.c.bf16 %v340, %v339
      %v347 = vpack.c.bf16 %v342, %v341
      %v348 = vpack.c.bf16 %v344, %v343
      %v349 = vld [vmem:[%s1] sm:$0xf]
      %v350 = vld [vmem:[%s1 + $0x4] sm:$0xf]
      %v351 = vld [vmem:[%s1 + $0x8] sm:$0xf]
      %v352 = vld [vmem:[%s1 + $0xc] sm:$0xf]
      %v353 = vld [vmem:[%s2] sm:$0x1]
      %v355 = vlaneseq
      %v356 = vshrl.u32 %v355, 7
      %v357 = vsub.s32 0, %v356
      %v358 = vrot.slane %v353, %v357
      %v364 = vunpack.c.l.b16 %v349
      %v365 = vunpack.c.l.b16 %v350
      %v366 = vunpack.c.l.b16 %v351
      %v367 = vunpack.c.l.b16 %v352
      %v368 = vpack.c.b16 %v365, %v364
      %v369 = vpack.c.b16 %v367, %v366
      %vm372 = vcmask 261120
      %v374 = vsel %vm372, %v345, 0
      %v377 = vsel %vm372, %v346, 0
      %v380 = vsel %vm372, %v347, 0
      %v383 = vsel %vm372, %v348, 0
      %385 = vmatprep.subr.bf16.mxu0 0
      %386 = vmatpush1.bf16.msra.mxu0 %v368
      %387 = vmatprep.subr.bf16.mxu0 0
      %388 = vmatpush1.bf16.msra.mxu0 %v369
      %389 = vmatprep.subr.bf16.mxu0 0
      %390 = vmatpush1.bf16.msra.mxu0 0
      %391 = vmatprep.subr.bf16.mxu0 0
      %392 = vmatpush1.bf16.msra.mxu0 0
      %393 = vmatprep.subr.bf16.mxu0 0
      %394 = vmatpush1.bf16.msra.mxu0 0
      %395 = vmatprep.subr.bf16.mxu0 0
      %396 = vmatpush1.bf16.msra.mxu0 0
      %397 = vmatprep.subr.bf16.mxu0 0
      %398 = vmatpush1.bf16.msra.mxu0 0
      %399 = vmatprep.subr.bf16.mxu0 0
      %400 = vmatpush1.bf16.msra.mxu0 0
      %401 = vmatprep.subr.bf16.mxu0 0
      %402 = vmatpush1.bf16.msra.mxu0 0
      %403 = vmatprep.subr.bf16.mxu0 0
      %404 = vmatpush1.bf16.msra.mxu0 0
      %405 = vmatprep.subr.bf16.mxu0 0
      %406 = vmatpush1.bf16.msra.mxu0 0
      %407 = vmatprep.subr.bf16.mxu0 0
      %408 = vmatpush1.bf16.msra.mxu0 0
      %409 = vmatprep.subr.bf16.mxu0 0
      %410 = vmatpush1.bf16.msra.mxu0 0
      %411 = vmatprep.subr.bf16.mxu0 0
      %412 = vmatpush1.bf16.msra.mxu0 0
      %413 = vmatprep.subr.bf16.mxu0 0
      %414 = vmatpush1.bf16.msra.mxu0 0
      %415 = vmatprep.subr.bf16.mxu0 0
      %416 = vmatpush1.bf16.msra.mxu0 0
      %417 = vmatprep.mubr.bf16.mxu0 0
      %418 = vmatmul.mubr.bf16.gmra.mrb[0].mxu0 %v374
      %v419 = vpop.f32.mrb[0].mxu0
      %v420 = vadd.f32 %v358, %v419
      %v421 = vpop.f32.mrb[0].mxu0
      %v422 = vpop.f32.mrb[0].mxu0
      %v423 = vadd.f32 %v358, %v422
      %v424 = vpop.f32.mrb[0].mxu0
      %425 = vmatprep.mubr.bf16.mxu0 0
      %426 = vmatmul.mubr.bf16.gmra.mrb[0].mxu0 %v377
      %v427 = vpop.f32.mrb[0].mxu0
      %v428 = vadd.f32 %v358, %v427
      %v429 = vpop.f32.mrb[0].mxu0
      %v430 = vpop.f32.mrb[0].mxu0
      %v431 = vadd.f32 %v358, %v430
      %v432 = vpop.f32.mrb[0].mxu0
      %433 = vmatprep.mubr.bf16.mxu0 0
      %434 = vmatmul.mubr.bf16.gmra.mrb[0].mxu0 %v380
      %v435 = vpop.f32.mrb[0].mxu0
      %v436 = vadd.f32 %v358, %v435
      %v437 = vpop.f32.mrb[0].mxu0
      %v438 = vpop.f32.mrb[0].mxu0
      %v439 = vadd.f32 %v358, %v438
      %v440 = vpop.f32.mrb[0].mxu0
      %441 = vmatprep.mubr.bf16.mxu0 0
      %442 = vmatmul.mubr.bf16.gmra.mrb[0].mxu0 %v383
      %v443 = vpop.f32.mrb[0].mxu0
      %v444 = vadd.f32 %v358, %v443
      %v445 = vpop.f32.mrb[0].mxu0
      %v446 = vpop.f32.mrb[0].mxu0
      %v447 = vadd.f32 %v358, %v446
      %v448 = vpop.f32.mrb[0].mxu0
      %449 = vdwg.mxu0
      %vm450 = vcmask 64512
      %v451 = vsel %vm450, %v420, -inf
      %452 = vmax.xlane.f32.xlu0 %v451
      %v453 = vpop.xlane.xlu0 %452
      %v454 = vsel %vm450, %v423, -inf
      %455 = vmax.xlane.f32.xlu0 %v454
      %v456 = vpop.xlane.xlu0 %455
      %v457 = vsel %vm450, %v428, -inf
      %458 = vmax.xlane.f32.xlu0 %v457
      %v459 = vpop.xlane.xlu0 %458
      %v460 = vsel %vm450, %v431, -inf
      %461 = vmax.xlane.f32.xlu0 %v460
      %v462 = vpop.xlane.xlu0 %461
      %v463 = vsel %vm450, %v436, -inf
      %464 = vmax.xlane.f32.xlu0 %v463
      %v465 = vpop.xlane.xlu0 %464
      %v466 = vsel %vm450, %v439, -inf
      %467 = vmax.xlane.f32.xlu0 %v466
      %v468 = vpop.xlane.xlu0 %467
      %v469 = vsel %vm450, %v444, -inf
      %470 = vmax.xlane.f32.xlu0 %v469
      %v471 = vpop.xlane.xlu0 %470
      %v472 = vsel %vm450, %v447, -inf
      %473 = vmax.xlane.f32.xlu0 %v472
      %v474 = vpop.xlane.xlu0 %473
      %v475 = vsub.f32 %v420, %v453
      %v476 = vsub.f32 %v423, %v456
      %v477 = vsub.f32 %v428, %v459
      %v478 = vsub.f32 %v431, %v462
      %v479 = vsub.f32 %v436, %v465
      %v480 = vsub.f32 %v439, %v468
      %v481 = vsub.f32 %v444, %v471
      %v482 = vsub.f32 %v447, %v474
      %v483 = vmul.f32 %v475, 1.442695
      %v484 = vpow.pop %v483
      %v485 = vmul.f32 %v476, 1.442695
      %v486 = vpow.pop %v485
      %v487 = vmul.f32 %v477, 1.442695
      %v488 = vpow.pop %v487
      %v489 = vmul.f32 %v478, 1.442695
      %v490 = vpow.pop %v489
      %v491 = vmul.f32 %v479, 1.442695
      %v492 = vpow.pop %v491
      %v493 = vmul.f32 %v480, 1.442695
      %v494 = vpow.pop %v493
      %v495 = vmul.f32 %v481, 1.442695
      %v496 = vpow.pop %v495
      %v497 = vmul.f32 %v482, 1.442695
      %v498 = vpow.pop %v497
      %v499 = vsel %vm450, %v484, 0.0
      %500 = vadd.xlane.f32.xlu0 %v499
      %v501 = vpop.xlane.xlu0 %500
      %v502 = vsel %vm450, %v486, 0.0
      %503 = vadd.xlane.f32.xlu0 %v502
      %v504 = vpop.xlane.xlu0 %503
      %v505 = vsel %vm450, %v488, 0.0
      %506 = vadd.xlane.f32.xlu0 %v505
      %v507 = vpop.xlane.xlu0 %506
      %v508 = vsel %vm450, %v490, 0.0
      %509 = vadd.xlane.f32.xlu0 %v508
      %v510 = vpop.xlane.xlu0 %509
      %v511 = vsel %vm450, %v492, 0.0
      %512 = vadd.xlane.f32.xlu0 %v511
      %v513 = vpop.xlane.xlu0 %512
      %v514 = vsel %vm450, %v494, 0.0
      %515 = vadd.xlane.f32.xlu0 %v514
      %v516 = vpop.xlane.xlu0 %515
      %v517 = vsel %vm450, %v496, 0.0
      %518 = vadd.xlane.f32.xlu0 %v517
      %v519 = vpop.xlane.xlu0 %518
      %v520 = vsel %vm450, %v498, 0.0
      %521 = vadd.xlane.f32.xlu0 %v520
      %v522 = vpop.xlane.xlu0 %521
      %v523 = vrcp.pop %v501
      %v524 = vrcp.pop %v504
      %v525 = vrcp.pop %v507
      %v526 = vrcp.pop %v510
      %v527 = vrcp.pop %v513
      %v528 = vrcp.pop %v516
      %v529 = vrcp.pop %v519
      %v530 = vrcp.pop %v522
      %v531 = vmul.f32 %v484, %v523
      %v532 = vmul.f32 %v486, %v524
      %v533 = vmul.f32 %v488, %v525
      %v534 = vmul.f32 %v490, %v526
      %v535 = vmul.f32 %v492, %v527
      %v536 = vmul.f32 %v494, %v528
      %v537 = vmul.f32 %v496, %v529
      %v538 = vmul.f32 %v498, %v530
      %v539 = vld [vmem:[%s3] sm:$0xf]
      %v540 = vld [vmem:[%s3 + $0x4] sm:$0xf]
      %v541 = vld [vmem:[%s3 + $0x8] sm:$0xf]
      %v542 = vld [vmem:[%s3 + $0xc] sm:$0xf]
      %v547 = vunpack.c.l.b16 %v539
      %v548 = vunpack.c.l.b16 %v540
      %v549 = vunpack.c.l.b16 %v541
      %v550 = vunpack.c.l.b16 %v542
      %v551 = vpack.c.b16 %v548, %v547
      %v552 = vpack.c.b16 %v550, %v549
      %555 = vmatprep.subr.bf16.mxu0 0
      %556 = vmatpush1.bf16.msra.mxu0 %v551
      %557 = vmatprep.subr.bf16.mxu0 0
      %558 = vmatpush1.bf16.msra.mxu0 %v552
      %559 = vmatprep.subr.bf16.mxu0 0
      %560 = vmatpush1.bf16.msra.mxu0 0
      %561 = vmatprep.subr.bf16.mxu0 0
      %562 = vmatpush1.bf16.msra.mxu0 0
      %563 = vmatprep.subr.bf16.mxu0 0
      %564 = vmatpush1.bf16.msra.mxu0 0
      %565 = vmatprep.subr.bf16.mxu0 0
      %566 = vmatpush1.bf16.msra.mxu0 0
      %567 = vmatprep.subr.bf16.mxu0 0
      %568 = vmatpush1.bf16.msra.mxu0 0
      %569 = vmatprep.subr.bf16.mxu0 0
      %570 = vmatpush1.bf16.msra.mxu0 0
      %571 = vmatprep.subr.bf16.mxu0 0
      %572 = vmatpush1.bf16.msra.mxu0 0
      %573 = vmatprep.subr.bf16.mxu0 0
      %574 = vmatpush1.bf16.msra.mxu0 0
      %575 = vmatprep.subr.bf16.mxu0 0
      %576 = vmatpush1.bf16.msra.mxu0 0
      %577 = vmatprep.subr.bf16.mxu0 0
      %578 = vmatpush1.bf16.msra.mxu0 0
      %579 = vmatprep.subr.bf16.mxu0 0
      %580 = vmatpush1.bf16.msra.mxu0 0
      %581 = vmatprep.subr.bf16.mxu0 0
      %582 = vmatpush1.bf16.msra.mxu0 0
      %583 = vmatprep.subr.bf16.mxu0 0
      %584 = vmatpush1.bf16.msra.mxu0 0
      %585 = vmatprep.subr.bf16.mxu0 0
      %586 = vmatpush1.bf16.msra.mxu0 0
      %587 = vmatprep.mubr.bf16.mxu0 0
      %588 = vmatmul.mubr.bf16.gmra.mrb[0].mxu0 %v374
      %v589 = vpop.f32.mrb[0].mxu0
      %v590 = vadd.f32 0.0, %v589
      %v591 = vpop.f32.mrb[0].mxu0
      %v592 = vpop.f32.mrb[0].mxu0
      %v593 = vadd.f32 0.0, %v592
      %v594 = vpop.f32.mrb[0].mxu0
      %595 = vmatprep.mubr.bf16.mxu0 0
      %596 = vmatmul.mubr.bf16.gmra.mrb[0].mxu0 %v377
      %v597 = vpop.f32.mrb[0].mxu0
      %v598 = vadd.f32 0.0, %v597
      %v599 = vpop.f32.mrb[0].mxu0
      %v600 = vpop.f32.mrb[0].mxu0
      %v601 = vadd.f32 0.0, %v600
      %v602 = vpop.f32.mrb[0].mxu0
      %603 = vmatprep.mubr.bf16.mxu0 0
      %604 = vmatmul.mubr.bf16.gmra.mrb[0].mxu0 %v380
      %v605 = vpop.f32.mrb[0].mxu0
      %v606 = vadd.f32 0.0, %v605
      %v607 = vpop.f32.mrb[0].mxu0
      %v608 = vpop.f32.mrb[0].mxu0
      %v609 = vadd.f32 0.0, %v608
      %v610 = vpop.f32.mrb[0].mxu0
      %611 = vmatprep.mubr.bf16.mxu0 0
      %612 = vmatmul.mubr.bf16.gmra.mrb[0].mxu0 %v383
      %v613 = vpop.f32.mrb[0].mxu0
      %v614 = vadd.f32 0.0, %v613
      %v615 = vpop.f32.mrb[0].mxu0
      %v616 = vpop.f32.mrb[0].mxu0
      %v617 = vadd.f32 0.0, %v616
      %v618 = vpop.f32.mrb[0].mxu0
      %619 = vdwg.mxu0
      %v620 = vmax.f32 %v590, 0.0
      %v621 = vmax.f32 %v593, 0.0
      %v622 = vmax.f32 %v598, 0.0
      %v623 = vmax.f32 %v601, 0.0
      %v624 = vmax.f32 %v606, 0.0
      %v625 = vmax.f32 %v609, 0.0
      %v626 = vmax.f32 %v614, 0.0
      %v627 = vmax.f32 %v617, 0.0
      %v628 = vld [vmem:[%s4] sm:$0xff]
      %v629 = vld [vmem:[%s4 + $0x8] sm:$0xff]
      %v630 = vld [vmem:[%s5] sm:$0x1]
      %v632 = vlaneseq
      %v633 = vshrl.u32 %v632, 7
      %v634 = vsub.s32 0, %v633
      %v635 = vrot.slane %v630, %v634
      %vm637 = vcmask 130048
      %v639 = vsel %vm637, %v620, 0
      %v642 = vsel %vm637, %v621, 0
      %v645 = vsel %vm637, %v622, 0
      %v648 = vsel %vm637, %v623, 0
      %v651 = vsel %vm637, %v624, 0
      %v654 = vsel %vm637, %v625, 0
      %v657 = vsel %vm637, %v626, 0
      %v660 = vsel %vm637, %v627, 0
      %662 = vmatprep.subr.mxu0 0.0
      %663 = vmatpush1.msra.mxu0 %v628
      %664 = vmatprep.subr.mxu0 0.0
      %665 = vmatpush1.msra.mxu0 %v629
      %666 = vmatprep.subr.mxu0 0.0
      %667 = vmatpush1.msra.mxu0 0.0
      %668 = vmatprep.subr.mxu0 0.0
      %669 = vmatpush1.msra.mxu0 0.0
      %670 = vmatprep.subr.mxu0 0.0
      %671 = vmatpush1.msra.mxu0 0.0
      %672 = vmatprep.subr.mxu0 0.0
      %673 = vmatpush1.msra.mxu0 0.0
      %674 = vmatprep.subr.mxu0 0.0
      %675 = vmatpush1.msra.mxu0 0.0
      %676 = vmatprep.subr.mxu0 0.0
      %677 = vmatpush1.msra.mxu0 0.0
      %678 = vmatprep.subr.mxu0 0.0
      %679 = vmatpush1.msra.mxu0 0.0
      %680 = vmatprep.subr.mxu0 0.0
      %681 = vmatpush1.msra.mxu0 0.0
      %682 = vmatprep.subr.mxu0 0.0
      %683 = vmatpush1.msra.mxu0 0.0
      %684 = vmatprep.subr.mxu0 0.0
      %685 = vmatpush1.msra.mxu0 0.0
      %686 = vmatprep.subr.mxu0 0.0
      %687 = vmatpush1.msra.mxu0 0.0
      %688 = vmatprep.subr.mxu0 0.0
      %689 = vmatpush1.msra.mxu0 0.0
      %690 = vmatprep.subr.mxu0 0.0
      %691 = vmatpush1.msra.mxu0 0.0
      %692 = vmatprep.subr.mxu0 0.0
      %693 = vmatpush1.msra.mxu0 0.0
      %694 = vmatprep.subr.mxu0 0.0
      %695 = vmatpush1.msra.mxu0 0.0
      %696 = vmatprep.subr.mxu0 0.0
      %697 = vmatpush1.msra.mxu0 0.0
      %698 = vmatprep.subr.mxu0 0.0
      %699 = vmatpush1.msra.mxu0 0.0
      %700 = vmatprep.subr.mxu0 0.0
      %701 = vmatpush1.msra.mxu0 0.0
      %702 = vmatprep.subr.mxu0 0.0
      %703 = vmatpush1.msra.mxu0 0.0
      %704 = vmatprep.subr.mxu0 0.0
      %705 = vmatpush1.msra.mxu0 0.0
      %706 = vmatprep.subr.mxu0 0.0
      %707 = vmatpush1.msra.mxu0 0.0
      %708 = vmatprep.subr.mxu0 0.0
      %709 = vmatpush1.msra.mxu0 0.0
      %710 = vmatprep.subr.mxu0 0.0
      %711 = vmatpush1.msra.mxu0 0.0
      %712 = vmatprep.subr.mxu0 0.0
      %713 = vmatpush1.msra.mxu0 0.0
      %714 = vmatprep.subr.mxu0 0.0
      %715 = vmatpush1.msra.mxu0 0.0
      %716 = vmatprep.subr.mxu0 0.0
      %717 = vmatpush1.msra.mxu0 0.0
      %718 = vmatprep.subr.mxu0 0.0
      %719 = vmatpush1.msra.mxu0 0.0
      %720 = vmatprep.subr.mxu0 0.0
      %721 = vmatpush1.msra.mxu0 0.0
      %722 = vmatprep.subr.mxu0 0.0
      %723 = vmatpush1.msra.mxu0 0.0
      %724 = vmatprep.subr.mxu0 0.0
      %725 = vmatpush1.msra.mxu0 0.0
      %726 = vmatprep.mubr.f32.mxu0 0.0
      %727 = vmatmul.mubr.f32.gmra.mrb[0].mxu0 %v639
      %v728 = vpop.f32.mrb[0].mxu0
      %v729 = vadd.f32 %v635, %v728
      %v730 = vpop.f32.mrb[0].mxu0
      %731 = vmatprep.mubr.f32.mxu0 0.0
      %732 = vmatmul.mubr.f32.gmra.mrb[0].mxu0 %v642
      %v733 = vpop.f32.mrb[0].mxu0
      %v734 = vadd.f32 %v635, %v733
      %v735 = vpop.f32.mrb[0].mxu0
      %736 = vmatprep.mubr.f32.mxu0 0.0
      %737 = vmatmul.mubr.f32.gmra.mrb[0].mxu0 %v645
      %v738 = vpop.f32.mrb[0].mxu0
      %v739 = vadd.f32 %v635, %v738
      %v740 = vpop.f32.mrb[0].mxu0
      %741 = vmatprep.mubr.f32.mxu0 0.0
      %742 = vmatmul.mubr.f32.gmra.mrb[0].mxu0 %v648
      %v743 = vpop.f32.mrb[0].mxu0
      %v744 = vadd.f32 %v635, %v743
      %v745 = vpop.f32.mrb[0].mxu0
      %746 = vmatprep.mubr.f32.mxu0 0.0
      %747 = vmatmul.mubr.f32.gmra.mrb[0].mxu0 %v651
      %v748 = vpop.f32.mrb[0].mxu0
      %v749 = vadd.f32 %v635, %v748
      %v750 = vpop.f32.mrb[0].mxu0
      %751 = vmatprep.mubr.f32.mxu0 0.0
      %752 = vmatmul.mubr.f32.gmra.mrb[0].mxu0 %v654
      %v753 = vpop.f32.mrb[0].mxu0
      %v754 = vadd.f32 %v635, %v753
      %v755 = vpop.f32.mrb[0].mxu0
      %756 = vmatprep.mubr.f32.mxu0 0.0
      %757 = vmatmul.mubr.f32.gmra.mrb[0].mxu0 %v657
      %v758 = vpop.f32.mrb[0].mxu0
      %v759 = vadd.f32 %v635, %v758
      %v760 = vpop.f32.mrb[0].mxu0
      %761 = vmatprep.mubr.f32.mxu0 0.0
      %762 = vmatmul.mubr.f32.gmra.mrb[0].mxu0 %v660
      %v763 = vpop.f32.mrb[0].mxu0
      %v764 = vadd.f32 %v635, %v763
      %v765 = vpop.f32.mrb[0].mxu0
      %766 = vdwg.mxu0
      %v767 = vsel %vm450, %v729, -inf
      %768 = vmax.xlane.f32.xlu0 %v767
      %v769 = vpop.xlane.xlu0 %768
      %v770 = vsel %vm450, %v734, -inf
      %771 = vmax.xlane.f32.xlu0 %v770
      %v772 = vpop.xlane.xlu0 %771
      %v773 = vsel %vm450, %v739, -inf
      %774 = vmax.xlane.f32.xlu0 %v773
      %v775 = vpop.xlane.xlu0 %774
      %v776 = vsel %vm450, %v744, -inf
      %777 = vmax.xlane.f32.xlu0 %v776
      %v778 = vpop.xlane.xlu0 %777
      %v779 = vsel %vm450, %v749, -inf
      %780 = vmax.xlane.f32.xlu0 %v779
      %v781 = vpop.xlane.xlu0 %780
      %v782 = vsel %vm450, %v754, -inf
      %783 = vmax.xlane.f32.xlu0 %v782
      %v784 = vpop.xlane.xlu0 %783
      %v785 = vsel %vm450, %v759, -inf
      %786 = vmax.xlane.f32.xlu0 %v785
      %v787 = vpop.xlane.xlu0 %786
      %v788 = vsel %vm450, %v764, -inf
      %789 = vmax.xlane.f32.xlu0 %v788
      %v790 = vpop.xlane.xlu0 %789
      %v791 = vsub.f32 %v729, %v769
      %v792 = vsub.f32 %v734, %v772
      %v793 = vsub.f32 %v739, %v775
      %v794 = vsub.f32 %v744, %v778
      %v795 = vsub.f32 %v749, %v781
      %v796 = vsub.f32 %v754, %v784
      %v797 = vsub.f32 %v759, %v787
      %v798 = vsub.f32 %v764, %v790
      %v799 = vmul.f32 %v791, 1.442695
      %v800 = vpow.pop %v799
      %v801 = vmul.f32 %v792, 1.442695
      %v802 = vpow.pop %v801
      %v803 = vmul.f32 %v793, 1.442695
      %v804 = vpow.pop %v803
      %v805 = vmul.f32 %v794, 1.442695
      %v806 = vpow.pop %v805
      %v807 = vmul.f32 %v795, 1.442695
      %v808 = vpow.pop %v807
      %v809 = vmul.f32 %v796, 1.442695
      %v810 = vpow.pop %v809
      %v811 = vmul.f32 %v797, 1.442695
      %v812 = vpow.pop %v811
      %v813 = vmul.f32 %v798, 1.442695
      %v814 = vpow.pop %v813
      %v815 = vsel %vm450, %v800, 0.0
      %816 = vadd.xlane.f32.xlu0 %v815
      %v817 = vpop.xlane.xlu0 %816
      %v818 = vsel %vm450, %v802, 0.0
      %819 = vadd.xlane.f32.xlu0 %v818
      %v820 = vpop.xlane.xlu0 %819
      %v821 = vsel %vm450, %v804, 0.0
      %822 = vadd.xlane.f32.xlu0 %v821
      %v823 = vpop.xlane.xlu0 %822
      %v824 = vsel %vm450, %v806, 0.0
      %825 = vadd.xlane.f32.xlu0 %v824
      %v826 = vpop.xlane.xlu0 %825
      %v827 = vsel %vm450, %v808, 0.0
      %828 = vadd.xlane.f32.xlu0 %v827
      %v829 = vpop.xlane.xlu0 %828
      %v830 = vsel %vm450, %v810, 0.0
      %831 = vadd.xlane.f32.xlu0 %v830
      %v832 = vpop.xlane.xlu0 %831
      %v833 = vsel %vm450, %v812, 0.0
      %834 = vadd.xlane.f32.xlu0 %v833
      %v835 = vpop.xlane.xlu0 %834
      %v836 = vsel %vm450, %v814, 0.0
      %837 = vadd.xlane.f32.xlu0 %v836
      %v838 = vpop.xlane.xlu0 %837
      %v839 = vrcp.pop %v817
      %v840 = vrcp.pop %v820
      %v841 = vrcp.pop %v823
      %v842 = vrcp.pop %v826
      %v843 = vrcp.pop %v829
      %v844 = vrcp.pop %v832
      %v845 = vrcp.pop %v835
      %v846 = vrcp.pop %v838
      %v847 = vmul.f32 %v800, %v839
      %v848 = vmul.f32 %v802, %v840
      %v849 = vmul.f32 %v804, %v841
      %v850 = vmul.f32 %v806, %v842
      %v851 = vmul.f32 %v808, %v843
      %v852 = vmul.f32 %v810, %v844
      %v853 = vmul.f32 %v812, %v845
      %v854 = vmul.f32 %v814, %v846
      %v855 = vld [vmem:[%s6] sm:$0xff]
      %v856 = vld [vmem:[%s7] sm:$0xff]
      %v858 = vsel %vm450, %v847, 0
      %v861 = vsel %vm450, %v848, 0
      %v864 = vsel %vm450, %v849, 0
      %v867 = vsel %vm450, %v850, 0
      %v870 = vsel %vm450, %v851, 0
      %v873 = vsel %vm450, %v852, 0
      %v876 = vsel %vm450, %v853, 0
      %v879 = vsel %vm450, %v854, 0
      %881 = vmatprep.subr.mxu0 0.0
      %882 = vmatpush1.msra.mxu0 %v856
      %883 = vmatprep.subr.mxu0 0.0
      %884 = vmatpush1.msra.mxu0 0.0
      %885 = vmatprep.subr.mxu0 0.0
      %886 = vmatpush1.msra.mxu0 0.0
      %887 = vmatprep.subr.mxu0 0.0
      %888 = vmatpush1.msra.mxu0 0.0
      %889 = vmatprep.subr.mxu0 0.0
      %890 = vmatpush1.msra.mxu0 0.0
      %891 = vmatprep.subr.mxu0 0.0
      %892 = vmatpush1.msra.mxu0 0.0
      %893 = vmatprep.subr.mxu0 0.0
      %894 = vmatpush1.msra.mxu0 0.0
      %895 = vmatprep.subr.mxu0 0.0
      %896 = vmatpush1.msra.mxu0 0.0
      %897 = vmatprep.subr.mxu0 0.0
      %898 = vmatpush1.msra.mxu0 0.0
      %899 = vmatprep.subr.mxu0 0.0
      %900 = vmatpush1.msra.mxu0 0.0
      %901 = vmatprep.subr.mxu0 0.0
      %902 = vmatpush1.msra.mxu0 0.0
      %903 = vmatprep.subr.mxu0 0.0
      %904 = vmatpush1.msra.mxu0 0.0
      %905 = vmatprep.subr.mxu0 0.0
      %906 = vmatpush1.msra.mxu0 0.0
      %907 = vmatprep.subr.mxu0 0.0
      %908 = vmatpush1.msra.mxu0 0.0
      %909 = vmatprep.subr.mxu0 0.0
      %910 = vmatpush1.msra.mxu0 0.0
      %911 = vmatprep.subr.mxu0 0.0
      %912 = vmatpush1.msra.mxu0 0.0
      %913 = vmatprep.subr.mxu0 0.0
      %914 = vmatpush1.msra.mxu0 0.0
      %915 = vmatprep.subr.mxu0 0.0
      %916 = vmatpush1.msra.mxu0 0.0
      %917 = vmatprep.subr.mxu0 0.0
      %918 = vmatpush1.msra.mxu0 0.0
      %919 = vmatprep.subr.mxu0 0.0
      %920 = vmatpush1.msra.mxu0 0.0
      %921 = vmatprep.subr.mxu0 0.0
      %922 = vmatpush1.msra.mxu0 0.0
      %923 = vmatprep.subr.mxu0 0.0
      %924 = vmatpush1.msra.mxu0 0.0
      %925 = vmatprep.subr.mxu0 0.0
      %926 = vmatpush1.msra.mxu0 0.0
      %927 = vmatprep.subr.mxu0 0.0
      %928 = vmatpush1.msra.mxu0 0.0
      %929 = vmatprep.subr.mxu0 0.0
      %930 = vmatpush1.msra.mxu0 0.0
      %931 = vmatprep.subr.mxu0 0.0
      %932 = vmatpush1.msra.mxu0 0.0
      %933 = vmatprep.subr.mxu0 0.0
      %934 = vmatpush1.msra.mxu0 0.0
      %935 = vmatprep.subr.mxu0 0.0
      %936 = vmatpush1.msra.mxu0 0.0
      %937 = vmatprep.subr.mxu0 0.0
      %938 = vmatpush1.msra.mxu0 0.0
      %939 = vmatprep.subr.mxu0 0.0
      %940 = vmatpush1.msra.mxu0 0.0
      %941 = vmatprep.subr.mxu0 0.0
      %942 = vmatpush1.msra.mxu0 0.0
      %943 = vmatprep.subr.mxu0 0.0
      %944 = vmatpush1.msra.mxu0 0.0
      %945 = vmatprep.mubr.f32.mxu0 0.0
      %946 = vmatmul.mubr.f32.gmra.mrb[0].mxu0 %v858
      %v947 = vpop.f32.mrb[0].mxu0
      %v948 = vadd.f32 0.0, %v947
      %v949 = vpop.f32.mrb[0].mxu0
      %950 = vmatprep.mubr.f32.mxu0 0.0
      %951 = vmatmul.mubr.f32.gmra.mrb[0].mxu0 %v861
      %v952 = vpop.f32.mrb[0].mxu0
      %v953 = vadd.f32 0.0, %v952
      %v954 = vpop.f32.mrb[0].mxu0
      %955 = vmatprep.mubr.f32.mxu0 0.0
      %956 = vmatmul.mubr.f32.gmra.mrb[0].mxu0 %v864
      %v957 = vpop.f32.mrb[0].mxu0
      %v958 = vadd.f32 0.0, %v957
      %v959 = vpop.f32.mrb[0].mxu0
      %960 = vmatprep.mubr.f32.mxu0 0.0
      %961 = vmatmul.mubr.f32.gmra.mrb[0].mxu0 %v867
      %v962 = vpop.f32.mrb[0].mxu0
      %v963 = vadd.f32 0.0, %v962
      %v964 = vpop.f32.mrb[0].mxu0
      %965 = vmatprep.mubr.f32.mxu0 0.0
      %966 = vmatmul.mubr.f32.gmra.mrb[0].mxu0 %v870
      %v967 = vpop.f32.mrb[0].mxu0
      %v968 = vadd.f32 0.0, %v967
      %v969 = vpop.f32.mrb[0].mxu0
      %970 = vmatprep.mubr.f32.mxu0 0.0
      %971 = vmatmul.mubr.f32.gmra.mrb[0].mxu0 %v873
      %v972 = vpop.f32.mrb[0].mxu0
      %v973 = vadd.f32 0.0, %v972
      %v974 = vpop.f32.mrb[0].mxu0
      %975 = vmatprep.mubr.f32.mxu0 0.0
      %976 = vmatmul.mubr.f32.gmra.mrb[0].mxu0 %v876
      %v977 = vpop.f32.mrb[0].mxu0
      %v978 = vadd.f32 0.0, %v977
      %v979 = vpop.f32.mrb[0].mxu0
      %980 = vmatprep.mubr.f32.mxu0 0.0
      %981 = vmatmul.mubr.f32.gmra.mrb[0].mxu0 %v879
      %v982 = vpop.f32.mrb[0].mxu0
      %v983 = vadd.f32 0.0, %v982
      %v984 = vpop.f32.mrb[0].mxu0
      %985 = vdwg.mxu0
      %v987 = vsel %vm450, %v531, 0
      %v990 = vsel %vm450, %v532, 0
      %v993 = vsel %vm450, %v533, 0
      %v996 = vsel %vm450, %v534, 0
      %v999 = vsel %vm450, %v535, 0
      %v1002 = vsel %vm450, %v536, 0
      %v1005 = vsel %vm450, %v537, 0
      %v1008 = vsel %vm450, %v538, 0
      %1010 = vmatprep.subr.mxu0 0.0
      %1011 = vmatpush1.msra.mxu0 %v855
      %1012 = vmatprep.subr.mxu0 0.0
      %1013 = vmatpush1.msra.mxu0 0.0
      %1014 = vmatprep.subr.mxu0 0.0
      %1015 = vmatpush1.msra.mxu0 0.0
      %1016 = vmatprep.subr.mxu0 0.0
      %1017 = vmatpush1.msra.mxu0 0.0
      %1018 = vmatprep.subr.mxu0 0.0
      %1019 = vmatpush1.msra.mxu0 0.0
      %1020 = vmatprep.subr.mxu0 0.0
      %1021 = vmatpush1.msra.mxu0 0.0
      %1022 = vmatprep.subr.mxu0 0.0
      %1023 = vmatpush1.msra.mxu0 0.0
      %1024 = vmatprep.subr.mxu0 0.0
      %1025 = vmatpush1.msra.mxu0 0.0
      %1026 = vmatprep.subr.mxu0 0.0
      %1027 = vmatpush1.msra.mxu0 0.0
      %1028 = vmatprep.subr.mxu0 0.0
      %1029 = vmatpush1.msra.mxu0 0.0
      %1030 = vmatprep.subr.mxu0 0.0
      %1031 = vmatpush1.msra.mxu0 0.0
      %1032 = vmatprep.subr.mxu0 0.0
      %1033 = vmatpush1.msra.mxu0 0.0
      %1034 = vmatprep.subr.mxu0 0.0
      %1035 = vmatpush1.msra.mxu0 0.0
      %1036 = vmatprep.subr.mxu0 0.0
      %1037 = vmatpush1.msra.mxu0 0.0
      %1038 = vmatprep.subr.mxu0 0.0
      %1039 = vmatpush1.msra.mxu0 0.0
      %1040 = vmatprep.subr.mxu0 0.0
      %1041 = vmatpush1.msra.mxu0 0.0
      %1042 = vmatprep.subr.mxu0 0.0
      %1043 = vmatpush1.msra.mxu0 0.0
      %1044 = vmatprep.subr.mxu0 0.0
      %1045 = vmatpush1.msra.mxu0 0.0
      %1046 = vmatprep.subr.mxu0 0.0
      %1047 = vmatpush1.msra.mxu0 0.0
      %1048 = vmatprep.subr.mxu0 0.0
      %1049 = vmatpush1.msra.mxu0 0.0
      %1050 = vmatprep.subr.mxu0 0.0
      %1051 = vmatpush1.msra.mxu0 0.0
      %1052 = vmatprep.subr.mxu0 0.0
      %1053 = vmatpush1.msra.mxu0 0.0
      %1054 = vmatprep.subr.mxu0 0.0
      %1055 = vmatpush1.msra.mxu0 0.0
      %1056 = vmatprep.subr.mxu0 0.0
      %1057 = vmatpush1.msra.mxu0 0.0
      %1058 = vmatprep.subr.mxu0 0.0
      %1059 = vmatpush1.msra.mxu0 0.0
      %1060 = vmatprep.subr.mxu0 0.0
      %1061 = vmatpush1.msra.mxu0 0.0
      %1062 = vmatprep.subr.mxu0 0.0
      %1063 = vmatpush1.msra.mxu0 0.0
      %1064 = vmatprep.subr.mxu0 0.0
      %1065 = vmatpush1.msra.mxu0 0.0
      %1066 = vmatprep.subr.mxu0 0.0
      %1067 = vmatpush1.msra.mxu0 0.0
      %1068 = vmatprep.subr.mxu0 0.0
      %1069 = vmatpush1.msra.mxu0 0.0
      %1070 = vmatprep.subr.mxu0 0.0
      %1071 = vmatpush1.msra.mxu0 0.0
      %1072 = vmatprep.subr.mxu0 0.0
      %1073 = vmatpush1.msra.mxu0 0.0
      %1074 = vmatprep.mubr.f32.mxu0 0.0
      %1075 = vmatmul.mubr.f32.gmra.mrb[0].mxu0 %v987
      %v1076 = vpop.f32.mrb[0].mxu0
      %v1077 = vadd.f32 %v948, %v1076
      %v1078 = vpop.f32.mrb[0].mxu0
      %1079 = vmatprep.mubr.f32.mxu0 0.0
      %1080 = vmatmul.mubr.f32.gmra.mrb[0].mxu0 %v990
      %v1081 = vpop.f32.mrb[0].mxu0
      %v1082 = vadd.f32 %v953, %v1081
      %v1083 = vpop.f32.mrb[0].mxu0
      %1084 = vmatprep.mubr.f32.mxu0 0.0
      %1085 = vmatmul.mubr.f32.gmra.mrb[0].mxu0 %v993
      %v1086 = vpop.f32.mrb[0].mxu0
      %v1087 = vadd.f32 %v958, %v1086
      %v1088 = vpop.f32.mrb[0].mxu0
      %1089 = vmatprep.mubr.f32.mxu0 0.0
      %1090 = vmatmul.mubr.f32.gmra.mrb[0].mxu0 %v996
      %v1091 = vpop.f32.mrb[0].mxu0
      %v1092 = vadd.f32 %v963, %v1091
      %v1093 = vpop.f32.mrb[0].mxu0
      %1094 = vmatprep.mubr.f32.mxu0 0.0
      %1095 = vmatmul.mubr.f32.gmra.mrb[0].mxu0 %v999
      %v1096 = vpop.f32.mrb[0].mxu0
      %v1097 = vadd.f32 %v968, %v1096
      %v1098 = vpop.f32.mrb[0].mxu0
      %1099 = vmatprep.mubr.f32.mxu0 0.0
      %1100 = vmatmul.mubr.f32.gmra.mrb[0].mxu0 %v1002
      %v1101 = vpop.f32.mrb[0].mxu0
      %v1102 = vadd.f32 %v973, %v1101
      %v1103 = vpop.f32.mrb[0].mxu0
      %1104 = vmatprep.mubr.f32.mxu0 0.0
      %1105 = vmatmul.mubr.f32.gmra.mrb[0].mxu0 %v1005
      %v1106 = vpop.f32.mrb[0].mxu0
      %v1107 = vadd.f32 %v978, %v1106
      %v1108 = vpop.f32.mrb[0].mxu0
      %1109 = vmatprep.mubr.f32.mxu0 0.0
      %1110 = vmatmul.mubr.f32.gmra.mrb[0].mxu0 %v1008
      %v1111 = vpop.f32.mrb[0].mxu0
      %v1112 = vadd.f32 %v983, %v1111
      %v1113 = vpop.f32.mrb[0].mxu0
      %1114 = vdwg.mxu0
      %v1115 = vld [vmem:[%s8] sm:$0x1]
      %v1117 = vlaneseq
      %v1118 = vshrl.u32 %v1117, 7
      %v1119 = vsub.s32 0, %v1118
      %v1120 = vrot.slane %v1115, %v1119
      %v1122 = vadd.f32 %v1077, %v1120
      %v1123 = vadd.f32 %v1082, %v1120
      %v1124 = vadd.f32 %v1087, %v1120
      %v1125 = vadd.f32 %v1092, %v1120
      %v1126 = vadd.f32 %v1097, %v1120
      %v1127 = vadd.f32 %v1102, %v1120
      %v1128 = vadd.f32 %v1107, %v1120
      %v1129 = vadd.f32 %v1112, %v1120
      %v1130 = vsel %vm450, %v1122, -inf
      %1131 = vmax.xlane.f32.xlu0 %v1130
      %v1132 = vpop.xlane.xlu0 %1131
      %v1133 = vsel %vm450, %v1123, -inf
      %1134 = vmax.xlane.f32.xlu0 %v1133
      %v1135 = vpop.xlane.xlu0 %1134
      %v1136 = vsel %vm450, %v1124, -inf
      %1137 = vmax.xlane.f32.xlu0 %v1136
      %v1138 = vpop.xlane.xlu0 %1137
      %v1139 = vsel %vm450, %v1125, -inf
      %1140 = vmax.xlane.f32.xlu0 %v1139
      %v1141 = vpop.xlane.xlu0 %1140
      %v1142 = vsel %vm450, %v1126, -inf
      %1143 = vmax.xlane.f32.xlu0 %v1142
      %v1144 = vpop.xlane.xlu0 %1143
      %v1145 = vsel %vm450, %v1127, -inf
      %1146 = vmax.xlane.f32.xlu0 %v1145
      %v1147 = vpop.xlane.xlu0 %1146
      %v1148 = vsel %vm450, %v1128, -inf
      %1149 = vmax.xlane.f32.xlu0 %v1148
      %v1150 = vpop.xlane.xlu0 %1149
      %v1151 = vsel %vm450, %v1129, -inf
      %1152 = vmax.xlane.f32.xlu0 %v1151
      %v1153 = vpop.xlane.xlu0 %1152
      %v1154 = vsub.f32 %v1122, %v1132
      %v1155 = vsub.f32 %v1123, %v1135
      %v1156 = vsub.f32 %v1124, %v1138
      %v1157 = vsub.f32 %v1125, %v1141
      %v1158 = vsub.f32 %v1126, %v1144
      %v1159 = vsub.f32 %v1127, %v1147
      %v1160 = vsub.f32 %v1128, %v1150
      %v1161 = vsub.f32 %v1129, %v1153
      %v1162 = vmul.f32 %v1154, 1.442695
      %v1163 = vpow.pop %v1162
      %v1164 = vmul.f32 %v1155, 1.442695
      %v1165 = vpow.pop %v1164
      %v1166 = vmul.f32 %v1156, 1.442695
      %v1167 = vpow.pop %v1166
      %v1168 = vmul.f32 %v1157, 1.442695
      %v1169 = vpow.pop %v1168
      %v1170 = vmul.f32 %v1158, 1.442695
      %v1171 = vpow.pop %v1170
      %v1172 = vmul.f32 %v1159, 1.442695
      %v1173 = vpow.pop %v1172
      %v1174 = vmul.f32 %v1160, 1.442695
      %v1175 = vpow.pop %v1174
      %v1176 = vmul.f32 %v1161, 1.442695
      %v1177 = vpow.pop %v1176
      %v1178 = vsel %vm450, %v1163, 0.0
      %1179 = vadd.xlane.f32.xlu0 %v1178
      %v1180 = vpop.xlane.xlu0 %1179
      %v1181 = vsel %vm450, %v1165, 0.0
      %1182 = vadd.xlane.f32.xlu0 %v1181
      %v1183 = vpop.xlane.xlu0 %1182
      %v1184 = vsel %vm450, %v1167, 0.0
      %1185 = vadd.xlane.f32.xlu0 %v1184
      %v1186 = vpop.xlane.xlu0 %1185
      %v1187 = vsel %vm450, %v1169, 0.0
      %1188 = vadd.xlane.f32.xlu0 %v1187
      %v1189 = vpop.xlane.xlu0 %1188
      %v1190 = vsel %vm450, %v1171, 0.0
      %1191 = vadd.xlane.f32.xlu0 %v1190
      %v1192 = vpop.xlane.xlu0 %1191
      %v1193 = vsel %vm450, %v1173, 0.0
      %1194 = vadd.xlane.f32.xlu0 %v1193
      %v1195 = vpop.xlane.xlu0 %1194
      %v1196 = vsel %vm450, %v1175, 0.0
      %1197 = vadd.xlane.f32.xlu0 %v1196
      %v1198 = vpop.xlane.xlu0 %1197
      %v1199 = vsel %vm450, %v1177, 0.0
      %1200 = vadd.xlane.f32.xlu0 %v1199
      %v1201 = vpop.xlane.xlu0 %1200
      %v1202 = vrcp.pop %v1180
      %v1203 = vrcp.pop %v1183
      %v1204 = vrcp.pop %v1186
      %v1205 = vrcp.pop %v1189
      %v1206 = vrcp.pop %v1192
      %v1207 = vrcp.pop %v1195
      %v1208 = vrcp.pop %v1198
      %v1209 = vrcp.pop %v1201
      %v1210 = vmul.f32 %v1163, %v1202
      %v1211 = vmul.f32 %v1165, %v1203
      %v1212 = vmul.f32 %v1167, %v1204
      %v1213 = vmul.f32 %v1169, %v1205
      %v1214 = vmul.f32 %v1171, %v1206
      %v1215 = vmul.f32 %v1173, %v1207
      %v1216 = vmul.f32 %v1175, %v1208
      %v1217 = vmul.f32 %v1177, %v1209
      %1218 = vrot.lane.b32.xlu0 %v847, 8
      %v1219 = vpop.permute.xlu0 %1218
      %1220 = vrot.lane.b32.xlu0 %v848, 8
      %v1221 = vpop.permute.xlu0 %1220
      %1222 = vrot.lane.b32.xlu0 %v849, 8
      %v1223 = vpop.permute.xlu0 %1222
      %1224 = vrot.lane.b32.xlu0 %v850, 8
      %v1225 = vpop.permute.xlu0 %1224
      %1226 = vrot.lane.b32.xlu0 %v851, 8
      %v1227 = vpop.permute.xlu0 %1226
      %1228 = vrot.lane.b32.xlu0 %v852, 8
      %v1229 = vpop.permute.xlu0 %1228
      %1230 = vrot.lane.b32.xlu0 %v853, 8
      %v1231 = vpop.permute.xlu0 %1230
      %1232 = vrot.lane.b32.xlu0 %v854, 8
      %v1233 = vpop.permute.xlu0 %1232
      %1250 = vrot.lane.b32.xlu0 %v1210, 16
      %v1251 = vpop.permute.xlu0 %1250
      %1252 = vrot.lane.b32.xlu0 %v1211, 16
      %v1253 = vpop.permute.xlu0 %1252
      %1254 = vrot.lane.b32.xlu0 %v1212, 16
      %v1255 = vpop.permute.xlu0 %1254
      %1256 = vrot.lane.b32.xlu0 %v1213, 16
      %v1257 = vpop.permute.xlu0 %1256
      %1258 = vrot.lane.b32.xlu0 %v1214, 16
      %v1259 = vpop.permute.xlu0 %1258
      %1260 = vrot.lane.b32.xlu0 %v1215, 16
      %v1261 = vpop.permute.xlu0 %1260
      %1262 = vrot.lane.b32.xlu0 %v1216, 16
      %v1263 = vpop.permute.xlu0 %1262
      %1264 = vrot.lane.b32.xlu0 %v1217, 16
      %v1265 = vpop.permute.xlu0 %1264
      %v1274 = vsel %vm450, %v531, %v1219
      %v1275 = vsel %vm450, %v532, %v1221
      %v1276 = vsel %vm450, %v533, %v1223
      %v1277 = vsel %vm450, %v534, %v1225
      %v1278 = vsel %vm450, %v535, %v1227
      %v1279 = vsel %vm450, %v536, %v1229
      %v1280 = vsel %vm450, %v537, %v1231
      %v1281 = vsel %vm450, %v538, %v1233
      %v1282 = vsel %vm637, %v1274, %v1251
      %v1283 = vsel %vm637, %v1275, %v1253
      %v1284 = vsel %vm637, %v1276, %v1255
      %v1285 = vsel %vm637, %v1277, %v1257
      %v1286 = vsel %vm637, %v1278, %v1259
      %v1287 = vsel %vm637, %v1279, %v1261
      %v1288 = vsel %vm637, %v1280, %v1263
      %v1289 = vsel %vm637, %v1281, %v1265
      %v1290 = vpack.c.bf16 %v1283, %v1282
      %v1291 = vpack.c.bf16 %v1285, %v1284
      %v1292 = vpack.c.bf16 %v1287, %v1286
      %v1293 = vpack.c.bf16 %v1289, %v1288
      %v1298 = vunpack.c.l.b16 %v1290
      %v1299 = vunpack.c.h.b16 %v1290
      %v1300 = vunpack.c.l.b16 %v1291
      %v1301 = vunpack.c.h.b16 %v1291
      %v1302 = vunpack.c.l.b16 %v1292
      %v1303 = vunpack.c.h.b16 %v1292
      %v1304 = vunpack.c.l.b16 %v1293
      %v1305 = vunpack.c.h.b16 %v1293
      %v1306 = vpack.c.b16 %v1298, %v1298
      %v1307 = vpack.c.b16 %v1299, %v1299
      %v1308 = vpack.c.b16 %v1300, %v1300
      %v1309 = vpack.c.b16 %v1301, %v1301
      %v1310 = vpack.c.b16 %v1302, %v1302
      %v1311 = vpack.c.b16 %v1303, %v1303
      %v1312 = vpack.c.b16 %v1304, %v1304
      %v1313 = vpack.c.b16 %v1305, %v1305
      %vm1322 = vcmask 191488
      %1323 = vst.msk [vmem:[%s334] sm:$0xf] %vm1322, %v1306
      %1324 = vst.msk [vmem:[%s334 + $0x4] sm:$0xf] %vm1322, %v1307
      %1325 = vst.msk [vmem:[%s334 + $0x8] sm:$0xf] %vm1322, %v1308
      %1326 = vst.msk [vmem:[%s334 + $0xc] sm:$0xf] %vm1322, %v1309
      %1327 = vst.msk [vmem:[%s334 + $0x10] sm:$0xf] %vm1322, %v1310
      %1328 = vst.msk [vmem:[%s334 + $0x14] sm:$0xf] %vm1322, %v1311
      %1329 = vst.msk [vmem:[%s334 + $0x18] sm:$0xf] %vm1322, %v1312
      %1330 = vst.msk [vmem:[%s334 + $0x1c] sm:$0xf] %vm1322, %v1313
      %s1331 = smul.u32 8, %s20
      %p1332 = scmp.lt.s32.totalorder %s1331, 31
      %s1333 = scalar_select %p1332, %s1331, 31
      %s1334 = smul.addr %s1333, 4
      %s1335 = scalar_lea.vmem %s9, %s1334
      // Predicated region
      $region57: #{tpu_custom_call.1} parent=55 // pred_check
        %p1336 = pneg %p232
      $region58: #{tpu_custom_call.1} parent=55 // pred_check_branch
        %1338 = sbr.rel (%p1336) target = $region60
      $region59: #{tpu_custom_call.1} parent=55 // pred_region
        %s1339 = smul.u32 8, %s20
      $region60: #{tpu_custom_call.1} parent=55 // pred_fallthru
        _
    $region56: #{tpu_custom_call.1} parent=5 // pred_fallthru
      _
    %p1340 = scmp.le.s32.totalorder 2, %s15
    // Predicated region
    $region61: #{tpu_custom_call.1} parent=5 // pred_check
      %p1341 = pneg %p1340
    $region62: #{tpu_custom_call.1} parent=5 // pred_check_branch
      %1343 = sbr.rel (%p1341) target = $region64
    $region63: #{tpu_custom_call.1} parent=5 // pred_region
      %s1344 = ssub.s32 %s15, 2
      // Predicated region
      $region65: #{tpu_custom_call.1} parent=63 // pred_check
        %p1345 = pneg %p238
      $region66: #{tpu_custom_call.1} parent=63 // pred_check_branch
        %1347 = sbr.rel (%p1345) target = $region68
      $region67: #{tpu_custom_call.1} parent=63 // pred_region
        %s1348 = smul.u32 8, %s21
        %p1349 = scmp.lt.s32.totalorder %s1348, 31
        %s1350 = scalar_select %p1349, %s1348, 31
        %s1351 = smul.addr %s1350, 4
        %s1352 = scalar_lea.vmem %s9, %s1351
      $region68: #{tpu_custom_call.1} parent=63 // pred_fallthru
        _
    $region64: #{tpu_custom_call.1} parent=5 // pred_fallthru
      _
  $region6: #{tpu_custom_call.1} parent=0 // loop_footer
    %s19 = sadd.s32 1, %s15
  $region7: #{tpu_custom_call.1} parent=0 // loop_footer_branch
    %14 = sbr.rel target = $region3
  $region8: #{tpu_custom_call.1} parent=0 // loop_exit
    _

</llo_original>
